<compile_context>
chip_gen: v7x
topology: tpu7x:2x2x1
jax: 0.10.0
libtpu: 0.0.40
codegen_flags: <defaults>
</compile_context>

<pallas_src>
import functools
import math

import jax
import jax.numpy as jnp
from jax.experimental import pallas as pl
from jax.experimental.pallas import tpu as pltpu


# ----------------------------- kernels ------------------------------------- #

def _pe_add_kernel_3d(x_ref, pe_ref, o_ref):
    # x_ref/o_ref: (tb, ts, D); pe_ref: (tb, 1, D) -> broadcast over sequence dim.
    o_ref[...] = x_ref[...] + pe_ref[...]


def _pe_add_kernel_folded(x_ref, pe_ref, o_ref, *, reps):
    # x_ref/o_ref: (tb, reps*D) lane-dense; pe_ref: (tb, D).
    # Lane-replicate pe in-kernel (cheap relative to the HBM-bound add) instead
    # of materializing the broadcast in HBM in the wrapper.
    o_ref[...] = x_ref[...] + jnp.tile(pe_ref[...], (1, reps))


# ----------------------------- helpers -------------------------------------- #

def _sublane_multiple(dtype) -> int:
    # Dtype-native sublane packing: 8 rows f32, 16 bf16, 32 int8/fp8.
    return {4: 8, 2: 16, 1: 32}.get(jnp.dtype(dtype).itemsize, 8)


def _round_down(x: int, m: int) -> int:
    return (x // m) * m


def _vmem_budget_bytes() -> int:
    # Generation-aware working-set budget: ~1/4 of per-core VMEM capacity
    # (v5e/v6e: 128 MiB -> 32 MiB, v7x: 64 MiB/TC -> 16 MiB). Conservative
    # 16 MiB fallback (safe on every generation).
    try:
        cap = int(pltpu.get_tpu_info().vmem_capacity_bytes)
        return max(16 * 1024 * 1024, cap // 4)
    except Exception:
        return 16 * 1024 * 1024


def _block_cap_bytes(total_bytes: int, budget: int) -> int:
    # Per-block byte cap: leave room for x/pe/out double-buffered (~6x), stay
    # in the measured 0.5-2 MiB sweet spot, and force >=4 grid steps once the
    # array exceeds a few hundred KiB so DMA-in / add / DMA-out overlap and
    # both v7x TensorCores get work.
    cap = min(budget // 6, 2 * 1024 * 1024)
    if total_bytes > 512 * 1024:
        cap = min(cap, max(512 * 1024, total_bytes // 4))
    return max(cap, 1)


def make_pe_table(d_model: int, max_seq_len: int = 512, dtype=jnp.float32) -> jnp.ndarray:
    """Sinusoidal table, shape (max_seq_len, 1, d_model) — same as the PyTorch buffer `pe`."""
    position = jnp.arange(max_seq_len, dtype=jnp.float32)[:, None]                 # (L, 1)
    div_term = jnp.exp(
        jnp.arange(0, d_model, 2, dtype=jnp.float32) * (-math.log(10000.0) / d_model)
    )                                                                              # (D/2,)
    angles = position * div_term                                                   # (L, D/2)
    table = jnp.zeros((max_seq_len, d_model), dtype=jnp.float32)
    table = table.at[:, 0::2].set(jnp.sin(angles))
    table = table.at[:, 1::2].set(jnp.cos(angles))
    return table[:, None, :].astype(dtype)                                         # (L, 1, D)


# ----------------------------- forward -------------------------------------- #

def positional_encoder_forward(x: jnp.ndarray, pe: jnp.ndarray, *,
                               donate_x: bool = False) -> jnp.ndarray:
    """x: (B, S, D); pe: (max_seq_len, 1, D). Returns x + pe[:B] (broadcast over S)."""
    B, S, D = x.shape
    max_seq_len = pe.shape[0]
    assert B <= max_seq_len, f"dim-0 of x ({B}) exceeds positional table length ({max_seq_len})"

    itemsize = jnp.dtype(x.dtype).itemsize
    sub = _sublane_multiple(x.dtype)
    budget = _vmem_budget_bytes()
    total_bytes = B * S * D * itemsize
    cap = _block_cap_bytes(total_bytes, budget)

    # Match x's dtype once in the wrapper; pe stays tiny (B, 1, D).
    pe_b = pe[:B].astype(x.dtype)

    cost = pl.CostEstimate(
        flops=B * S * D,
        transcendentals=0,
        bytes_accessed=(2 * B * S * D + B * D) * itemsize,
    )
    compiler_params = pltpu.CompilerParams(
        dimension_semantics=("parallel", "parallel"),
        vmem_limit_bytes=int(budget),
    )
    io_aliases = {0: 0} if donate_x else {}

    if D % 128 == 0:
        # ---- Path A: D already lane-dense -> natural 3-D blocks, pe broadcast
        # over the sequence dim inside the kernel (no fold needed). ----
        row_bytes = S * D * itemsize                     # one full batch row
        tb_max = cap // row_bytes
        if tb_max >= 1:
            tb, ts = min(B, int(tb_max)), S
        else:
            # Rows too wide for even one per block: tile the sequence dim.
            tb = 1
            ts_max = max(1, cap // (D * itemsize))
            ts = S if ts_max >= S else max(sub, _round_down(int(ts_max), sub))
        grid = (pl.cdiv(B, tb), pl.cdiv(S, ts))

        return pl.pallas_call(
            _pe_add_kernel_3d,
            out_shape=jax.ShapeDtypeStruct((B, S, D), x.dtype),
            grid_spec=pltpu.PrefetchScalarGridSpec(
                num_scalar_prefetch=0,
                grid=grid,
                in_specs=[
                    pl.BlockSpec((tb, ts, D), lambda i, j: (i, j, 0)),
                    pl.BlockSpec((tb, 1, D), lambda i, j: (i, 0, 0)),
                ],
                out_specs=pl.BlockSpec((tb, ts, D), lambda i, j: (i, j, 0)),
            ),
            compiler_params=compiler_params,
            cost_estimate=cost,
            input_output_aliases=io_aliases,
        )(x, pe_b)

    # ---- Path B: narrow / non-aligned D (< 128): fold (S, D) -> S*D so stores
    # are unmasked; pe stays (B, D) and is lane-replicated in-kernel. ----
    W = S * D
    x2 = x.reshape(B, W)                                 # metadata-only reshape
    pe2 = pe_b.reshape(B, D)

    row_bytes = W * itemsize
    tb_max = cap // row_bytes
    if tb_max >= B:
        tb, chunk = B, W                                 # whole batch / full rows
    elif tb_max >= sub:
        tb, chunk = _round_down(int(tb_max), sub), W     # partial batch, full rows
    else:
        # Rows too wide for even `sub` of them per block: tile the lane dim in
        # chunks that are multiples of 128 (lane density) AND of D (so pe tiles
        # evenly into each chunk) — never inflate the sublane tile past budget.
        tb = B if B < sub else sub
        unit = (128 * D) // math.gcd(128, D)             # lcm(128, D)
        chunk_max = max(1, cap // (tb * itemsize))
        chunk = max(unit, _round_down(int(chunk_max), unit))
        if chunk > W:
            chunk = W                                    # degenerate: full row
    reps = chunk // D                                    # chunk % D == 0 by construction
    grid = (pl.cdiv(B, tb), pl.cdiv(W, chunk))

    out2 = pl.pallas_call(
        functools.partial(_pe_add_kernel_folded, reps=reps),
        out_shape=jax.ShapeDtypeStruct((B, W), x.dtype),
        grid_spec=pltpu.PrefetchScalarGridSpec(
            num_scalar_prefetch=0,
            grid=grid,
            in_specs=[
                pl.BlockSpec((tb, chunk), lambda i, j: (i, j)),
                pl.BlockSpec((tb, D), lambda i, j: (i, 0)),
            ],
            out_specs=pl.BlockSpec((tb, chunk), lambda i, j: (i, j)),
        ),
        compiler_params=compiler_params,
        cost_estimate=cost,
        input_output_aliases=io_aliases,
    )(x2, pe2)

    return out2.reshape(B, S, D)


# ------------------------------- test --------------------------------------- #

if __name__ == "__main__":
    # Small shapes consistent with the forward: batch=2, series_length=8, fea_dim=32.
    B, S, D = 2, 8, 32
    max_seq_len = 512

    key = jax.random.PRNGKey(0)
    x = jax.random.normal(key, (B, S, D), dtype=jnp.float32)

    pe = make_pe_table(D, max_seq_len)

    # Reference (plain JAX), exact PyTorch semantics: x + pe[:B] (broadcast over S).
    ref = x + pe[:B].astype(x.dtype)

    out = positional_encoder_forward(x, pe)
    out = jax.block_until_ready(out)

    assert out.shape == (B, S, D)
    assert jnp.allclose(out, ref, atol=1e-6), "mismatch vs reference"

    print("KERNEL_OK")
</pallas_src>

<mosaic_0001>
module attributes {stable_mosaic.version = 11 : i64} {
  func.func @_pe_add_kernel_folded(%arg0: i32, %arg1: i32, %arg2: memref<2x256xf32, #tpu.memory_space<vmem>>, %arg3: memref<2x32xf32, #tpu.memory_space<vmem>>, %arg4: memref<2x256xf32, #tpu.memory_space<vmem>>) attributes {dimension_semantics = [#tpu.dimension_semantics<parallel>, #tpu.dimension_semantics<parallel>], iteration_bounds = array<i64: 1, 1>, scalar_prefetch = 0 : i64, scratch_operands = 0 : i64, tpu.core_type = #tpu.core_type<tc>, window_params = [{transform_indices = @transform_0, window_bounds = array<i64: 2, 256>}, {transform_indices = @transform_1, window_bounds = array<i64: 2, 32>}, {transform_indices = @transform_2, window_bounds = array<i64: 2, 256>}]} {
    %c0 = arith.constant 0 : index
    %c0_0 = arith.constant 0 : index
    %0 = vector.load %arg2[%c0, %c0_0] : memref<2x256xf32, #tpu.memory_space<vmem>>, vector<2x256xf32>
    %c0_1 = arith.constant 0 : index
    %c0_2 = arith.constant 0 : index
    %1 = vector.load %arg3[%c0_1, %c0_2] : memref<2x32xf32, #tpu.memory_space<vmem>>, vector<2x32xf32>
    %2 = tpu.concatenate %1, %1, %1, %1, %1, %1, %1, %1 in 1 : vector<2x32xf32>, vector<2x32xf32>, vector<2x32xf32>, vector<2x32xf32>, vector<2x32xf32>, vector<2x32xf32>, vector<2x32xf32>, vector<2x32xf32> -> vector<2x256xf32>
    %3 = arith.addf %0, %2 : vector<2x256xf32>
    %c0_3 = arith.constant 0 : index
    %c0_4 = arith.constant 0 : index
    %4 = vector.load %arg4[%c0_3, %c0_4] : memref<2x256xf32, #tpu.memory_space<vmem>>, vector<2x256xf32>
    tpu.vector_store %arg4[%c0_3, %c0_4], %3 {strides = array<i32>} : memref<2x256xf32, #tpu.memory_space<vmem>>, vector<2x256xf32>,
    return
  }
  func.func @transform_0(%arg0: i32, %arg1: i32) -> (i32, i32) {
    %c0_i32 = arith.constant 0 : i32
    return %arg0, %arg1 : i32, i32
  }
  func.func @transform_1(%arg0: i32, %arg1: i32) -> (i32, i32) {
    %c0_i32 = arith.constant 0 : i32
    %c0_i32_0 = arith.constant 0 : i32
    return %arg0, %c0_i32 : i32, i32
  }
  func.func @transform_2(%arg0: i32, %arg1: i32) -> (i32, i32) {
    %c0_i32 = arith.constant 0 : i32
    return %arg0, %arg1 : i32, i32
  }
}

</mosaic_0001>

<llo_original>
// kernel: tpu_custom_call.1
$region0: #{tpu_custom_call.1}
  #allocation0 [shape = 'u32[]', space=smem, size = 0x4, offset = 0x4, fixed_abs, tag = 'smem constant byte address 0x4 - core index']
  #allocation1 [shape = 'u32[144,128]{1,0:T(1,128)}', space=vmem, size = 0x12000, scoped, tag = 'internal scratch']
  %s0 = inlined_call_operand.hbm [shape: f32[2,256], index: 0, kind: input, shape index: {}]
  %s1 = inlined_call_operand.vmem [shape: f32[2,32], index: 1, kind: input, shape index: {}]
  %s2 = inlined_call_operand.hbm [shape: f32[2,256], index: 2, kind: output, shape index: {}]
  %s3 = sld [smem:[#allocation0]]
  $region22: #{tpu_custom_call.1} parent=0
    _
  %s5 = ssub.s32 1, %s3
  %s6 = scalar_select 0, %s5, %s3
  $region1: #{tpu_custom_call.1} parent=0
    #allocation2 [shape = 'u8[2048]{0}', space=vmem, size = 0x800, scoped, tag = 'input window, operand 0, single buffered']
    #allocation3 [shape = 's32[1]{0}', space=sflag, size = 0x4, scoped, tag = 'scoped memory for tpu_custom_call.1']
    #allocation4 [shape = 's32[1]{0}', space=sflag, size = 0x4, scoped, tag = 'scoped memory for tpu_custom_call.1']
    #allocation5 [shape = 'u8[2048]{0}', space=vmem, size = 0x800, scoped, tag = 'output window, operand 0, single buffered']
    %7 = vsyncpa [#allocation3], 0
    %8 = vsyncpa [#allocation4], 0
    // Predicated region
    $region2: #{tpu_custom_call.1} parent=1 // pred_check
      _
    $region3: #{tpu_custom_call.1} parent=1 // pred_check_branch
      %10 = sbr.rel (0) target = $region5
    $region4: #{tpu_custom_call.1} parent=1 // pred_region
      %s12 = ssub.s32 64, 64
      %13 = vsyncadd [#allocation3], %s12
      %s15 = sshll.u32 [#allocation2], 4
      %s16 = int_to_ptr.vmem [resolvable:$true] %s15
      %18 = dma.hbm_to_vmem [thread:$0]  %s0, 64, %s16, [#allocation3]
    $region5: #{tpu_custom_call.1} parent=1 // pred_fallthru
      _
    // Predicated region
    $region6: #{tpu_custom_call.1} parent=1 // pred_check
      _
    $region7: #{tpu_custom_call.1} parent=1 // pred_check_branch
      %20 = sbr.rel (0) target = $region9
    $region8: #{tpu_custom_call.1} parent=1 // pred_region
      _
    $region9: #{tpu_custom_call.1} parent=1 // pred_fallthru
      _
    // Predicated region
    $region10: #{tpu_custom_call.1} parent=1 // pred_check
      _
    $region11: #{tpu_custom_call.1} parent=1 // pred_check_branch
      %22 = sbr.rel (0) target = $region13
    $region12: #{tpu_custom_call.1} parent=1 // pred_region
      %23 = dma.done [#allocation3], 64
    $region13: #{tpu_custom_call.1} parent=1 // pred_fallthru
      _
    %v24 = vld [vmem:[#allocation2] sm:$0xf]
    %v25 = vld [vmem:[%s1] sm:$0x3]
    %27 = vrot.lane.b32.xlu0 %v25, 32
    %v28 = vpop.permute.xlu0 %27
    %30 = vrot.lane.b32.xlu0 %v25, 64
    %v31 = vpop.permute.xlu0 %30
    %33 = vrot.lane.b32.xlu0 %v25, 96
    %v34 = vpop.permute.xlu0 %33
    %vm36 = vcmask 261120
    %v37 = vsel %vm36, %v25, %v28
    %vm38 = vcmask 523264
    %v39 = vsel %vm38, %v37, %v31
    %vm40 = vcmask 785408
    %v41 = vsel %vm40, %v39, %v34
    %v43 = vcombine.low %v41, %v41
    %v45 = vunpack.c.l.s4 1983009808
    %v46 = vunpack.c.0.s8 %v45
    %v47 = vlaneseq
    %v48 = vshrl.u32 %v47, 7
    %v49 = vsub.s32 %v46, %v48
    %v50 = vrot.slane %v43, %v49
    %v52 = vadd.f32 %v24, %v50
    %53 = vst [vmem:[#allocation5] sm:$0xf] %v52
    // Predicated region
    $region14: #{tpu_custom_call.1} parent=1 // pred_check
      _
    $region15: #{tpu_custom_call.1} parent=1 // pred_check_branch
      %55 = sbr.rel (0) target = $region17
    $region16: #{tpu_custom_call.1} parent=1 // pred_region
      %s57 = ssub.s32 64, 64
      %58 = vsyncadd [#allocation4], %s57
      %s60 = sshll.u32 [#allocation5], 4
      %s61 = int_to_ptr.vmem [resolvable:$true] %s60
      %63 = dma.vmem_to_hbm [thread:$0]  %s61, 64, %s2, [#allocation4]
    $region17: #{tpu_custom_call.1} parent=1 // pred_fallthru
      _
    // Predicated region
    $region18: #{tpu_custom_call.1} parent=1 // pred_check
      _
    $region19: #{tpu_custom_call.1} parent=1 // pred_check_branch
      %65 = sbr.rel (0) target = $region21
    $region20: #{tpu_custom_call.1} parent=1 // pred_region
      %66 = dma.done [#allocation4], 64
    $region21: #{tpu_custom_call.1} parent=1 // pred_fallthru
      _
    %67 = vsyncpa [#allocation3], 1
    %68 = vsyncpa [#allocation4], 1

</llo_original>
